<compile_context>
chip_gen: v7x
topology: tpu7x:2x2x1
jax: 0.10.0
libtpu: 0.0.40
codegen_flags: <defaults>
</compile_context>

<pallas_src>
import jax
import jax.numpy as jnp
from jax.experimental import pallas as pl
from jax.experimental.pallas import tpu as pltpu

N_SLOTS = 16                          # tracklet memory slots
DIM = 32                              # embedding dimension
LANE = 128                            # TPU lane width
LD_ROWS = (N_SLOTS * DIM) // LANE     # lane-dense rows for the [N, D] state
assert (N_SLOTS * DIM) % LANE == 0


# --------------------------------------------------------------------------
# Pallas kernel: T masked EMA writes with VMEM-resident state
# --------------------------------------------------------------------------
def _batched_write_kernel(states_in_ref, last_in_ref, obs_ref, mask_full_ref,
                          mask_slot_ref, frames_ref, alpha_ref,
                          states_out_ref, last_out_ref):
    t = pl.program_id(0)

    # Initialize the resident accumulators from the (aliased) inputs once.
    @pl.when(t == 0)
    def _init():
        states_out_ref[...] = states_in_ref[...]
        last_out_ref[...] = last_in_ref[...]

    alpha = alpha_ref[0]            # f32 scalar (SMEM)
    frame = frames_ref[t]           # i32 scalar (SMEM): this transaction's frame

    mem = states_out_ref[...]       # [LD_ROWS, LANE] f32 accumulator
    obs = obs_ref[...]              # [LD_ROWS, LANE] f32
    m_full = mask_full_ref[...]     # [LD_ROWS, LANE] f32 per-element mask

    updated = (1.0 - alpha) * mem + alpha * obs
    states_out_ref[...] = jnp.where(m_full > 0.5, updated, mem)

    last = last_out_ref[...]        # [1, N_SLOTS] i32 accumulator
    m_slot = mask_slot_ref[...]     # [1, N_SLOTS] f32 per-slot mask
    last_out_ref[...] = jnp.where(m_slot > 0.5, frame, last)


def _smem_spec():
    return pl.BlockSpec(memory_space=pltpu.MemorySpace.SMEM)


# --------------------------------------------------------------------------
# Wrappers (jit'ed so the pallas_call is not re-dispatched from Python)
# --------------------------------------------------------------------------
@jax.jit
def batched_memory_write(states, last_seen, masks, obs, frames, alpha):
    """Apply T write transactions in a single pallas_call.

    states:    [N, D]    f32
    last_seen: [1, N]    i32
    masks:     [T, N]    f32 (0/1)
    obs:       [T, N, D] f32
    frames:    [T]       i32
    alpha:     []        f32
    """
    T = obs.shape[0]
    states_ld = states.reshape(LD_ROWS, LANE)                 # lane-dense state
    obs_ld = obs.reshape(T, LD_ROWS, LANE)                    # lane-dense obs
    mask_full = jnp.broadcast_to(
        masks[:, :, None], (T, N_SLOTS, DIM)).reshape(T, LD_ROWS, LANE)
    mask_slot = masks.reshape(T, 1, N_SLOTS)
    alpha_arr = jnp.reshape(alpha, (1,)).astype(jnp.float32)  # 1-D SMEM scalar
    frames = frames.astype(jnp.int32)

    grid_spec = pltpu.PrefetchScalarGridSpec(
        num_scalar_prefetch=0,
        grid=(T,),
        in_specs=[
            pl.BlockSpec((LD_ROWS, LANE), lambda t: (0, 0)),           # states (resident)
            pl.BlockSpec((1, N_SLOTS), lambda t: (0, 0)),              # last_seen (resident)
            pl.BlockSpec((None, LD_ROWS, LANE), lambda t: (t, 0, 0)),  # obs[t]
            pl.BlockSpec((None, LD_ROWS, LANE), lambda t: (t, 0, 0)),  # mask_full[t]
            pl.BlockSpec((None, 1, N_SLOTS), lambda t: (t, 0, 0)),     # mask_slot[t]
            _smem_spec(),                                              # frames (SMEM)
            _smem_spec(),                                              # alpha  (SMEM)
        ],
        out_specs=(
            pl.BlockSpec((LD_ROWS, LANE), lambda t: (0, 0)),
            pl.BlockSpec((1, N_SLOTS), lambda t: (0, 0)),
        ),
    )

    new_states_ld, new_last = pl.pallas_call(
        _batched_write_kernel,
        out_shape=(
            jax.ShapeDtypeStruct((LD_ROWS, LANE), jnp.float32),
            jax.ShapeDtypeStruct((1, N_SLOTS), jnp.int32),
        ),
        grid_spec=grid_spec,
        input_output_aliases={0: 0, 1: 1},   # in-place state update
        compiler_params=pltpu.CompilerParams(
            dimension_semantics=("arbitrary",)),  # state is carried across t
    )(states_ld, last_seen, obs_ld, mask_full, mask_slot, frames, alpha_arr)

    return new_states_ld.reshape(N_SLOTS, DIM), new_last


@jax.jit
def memory_read(states, last_seen, frame):
    # Per perf feedback: no separate read kernel — a second pallas_call costs
    # more in dispatch than the ~2 KiB of work; XLA fuses this trivially.
    delta = jnp.asarray(frame, jnp.int32) - last_seen
    return states, delta


# --------------------------------------------------------------------------
# Functional equivalent of _MemoryReadWriter (state carried explicitly)
# --------------------------------------------------------------------------
class MemoryReadWriter:
    # TODO(synk): the real TrackletMemory keeps typed TensorDict fields and
    # checkpointed state; here a deterministic EMA + last_seen memory stands in.

    def __init__(self, alpha=0.9, num_slots=N_SLOTS, dim=DIM):
        self.alpha = jnp.float32(alpha)
        k0, _ = jax.random.split(jax.random.PRNGKey(0))
        self.states = jax.random.normal(k0, (num_slots, dim), dtype=jnp.float32)
        self.last_seen = jnp.zeros((1, num_slots), dtype=jnp.int32)

    def forward(self, write: bool, transaction):
        if write:
            ctx, obs, new = transaction            # mask(s), embeddings, frame(s)
            ctx = jnp.asarray(ctx, jnp.float32)
            obs = jnp.asarray(obs, jnp.float32)
            if obs.ndim == 2:                      # single transaction
                ctx = ctx.reshape(1, N_SLOTS)
                obs = obs[None]
                frames = jnp.asarray([new], dtype=jnp.int32)
            else:                                  # batch of T transactions
                ctx = ctx.reshape(-1, N_SLOTS)
                frames = jnp.asarray(new, dtype=jnp.int32)
            new_states, new_last = batched_memory_write(
                self.states, self.last_seen, ctx, obs, frames, self.alpha)
            self.states, self.last_seen = new_states, new_last
            return new_states, new_last
        else:
            (frame,) = transaction
            return memory_read(self.states, self.last_seen,
                               jnp.asarray(frame, jnp.int32))


# --------------------------------------------------------------------------
if __name__ == "__main__":
    rw = MemoryReadWriter(alpha=0.9)
    init_states = rw.states

    T = 8
    k_obs, k_obs1 = jax.random.split(jax.random.PRNGKey(0))
    obs = jax.random.normal(k_obs, (T, N_SLOTS, DIM), dtype=jnp.float32)
    slot_ids = jnp.arange(N_SLOTS)
    masks = (((slot_ids[None, :] + jnp.arange(T)[:, None]) % 2) == 0)
    masks = masks.astype(jnp.float32)                      # [T, N]
    frames = jnp.arange(1, T + 1, dtype=jnp.int32)         # frame ids 1..T

    # batched write: T transactions in one pallas_call
    new_states, new_last = rw.forward(True, (masks, obs, frames))
    jax.block_until_ready((new_states, new_last))

    # single-frame write (original per-call semantics, T=1 through same kernel)
    obs1 = jax.random.normal(k_obs1, (N_SLOTS, DIM), dtype=jnp.float32)
    mask1 = (slot_ids % 4 == 0).astype(jnp.float32)        # [N]
    frame1 = T + 1
    s1, l1 = rw.forward(True, (mask1, obs1, frame1))
    jax.block_until_ready((s1, l1))

    # read transaction: (frame,)
    read_frame = T + 3
    states_rd, delta = rw.forward(False, (read_frame,))
    jax.block_until_ready((states_rd, delta))

    # ------------------------ pure-JAX reference ------------------------
    alpha_f = jnp.float32(0.9)
    ref_states = init_states
    ref_last = jnp.zeros((1, N_SLOTS), dtype=jnp.int32)
    for t in range(T):
        upd = (1.0 - alpha_f) * ref_states + alpha_f * obs[t]
        ref_states = jnp.where(masks[t][:, None] > 0.5, upd, ref_states)
        ref_last = jnp.where(masks[t][None, :] > 0.5, frames[t], ref_last)
    ref_states_T, ref_last_T = ref_states, ref_last        # after batched write

    upd = (1.0 - alpha_f) * ref_states + alpha_f * obs1
    ref_states = jnp.where(mask1[:, None] > 0.5, upd, ref_states)
    ref_last = jnp.where(mask1[None, :] > 0.5, jnp.int32(frame1), ref_last)
    ref_delta = jnp.int32(read_frame) - ref_last

    # shape-safe checks (no implicit broadcasting between (N,) and (N,1))
    assert new_states.shape == (N_SLOTS, DIM) and new_last.shape == (1, N_SLOTS)
    assert s1.shape == (N_SLOTS, DIM) and l1.shape == (1, N_SLOTS)
    assert delta.shape == (1, N_SLOTS)
    assert jnp.allclose(new_states, ref_states_T, atol=1e-5, rtol=1e-5)
    assert jnp.array_equal(new_last, ref_last_T)
    assert jnp.allclose(s1, ref_states, atol=1e-5, rtol=1e-5)
    assert jnp.array_equal(l1, ref_last)
    assert jnp.allclose(states_rd, ref_states, atol=1e-5, rtol=1e-5)
    assert jnp.array_equal(delta, ref_delta)
    print("KERNEL_OK")
</pallas_src>

<mosaic_0001>
module attributes {stable_mosaic.version = 11 : i64} {
  func.func @_batched_write_kernel(%arg0: i32, %arg1: memref<4x128xf32, #tpu.memory_space<vmem>>, %arg2: memref<1x16xi32, #tpu.memory_space<vmem>>, %arg3: memref<1x4x128xf32, #tpu.memory_space<vmem>>, %arg4: memref<1x4x128xf32, #tpu.memory_space<vmem>>, %arg5: memref<1x1x16xf32, #tpu.memory_space<vmem>>, %arg6: memref<8xi32, #tpu.memory_space<smem>>, %arg7: memref<1xf32, #tpu.memory_space<smem>>, %arg8: memref<4x128xf32, #tpu.memory_space<vmem>>, %arg9: memref<1x16xi32, #tpu.memory_space<vmem>>) attributes {dimension_semantics = [#tpu.dimension_semantics<arbitrary>], iteration_bounds = array<i64: 8>, scalar_prefetch = 0 : i64, scratch_operands = 0 : i64, tpu.core_type = #tpu.core_type<tc>, window_params = [{pipeline_mode = #tpu.pipeline_mode<synchronous>, transform_indices = @transform_0, window_bounds = array<i64: 4, 128>}, {pipeline_mode = #tpu.pipeline_mode<synchronous>, transform_indices = @transform_1, window_bounds = array<i64: 1, 16>}, {transform_indices = @transform_2, window_bounds = array<i64: 1, 4, 128>}, {transform_indices = @transform_3, window_bounds = array<i64: 1, 4, 128>}, {transform_indices = @transform_4, window_bounds = array<i64: 1, 1, 16>}, {transform_indices = @transform_5, window_bounds = array<i64: 8>}, {transform_indices = @transform_6, window_bounds = array<i64: 1>}, {pipeline_mode = #tpu.pipeline_mode<synchronous>, transform_indices = @transform_7, window_bounds = array<i64: 4, 128>}, {pipeline_mode = #tpu.pipeline_mode<synchronous>, transform_indices = @transform_8, window_bounds = array<i64: 1, 16>}]} {
    %c0_i32 = arith.constant 0 : i32
    %0 = arith.cmpi eq, %arg0, %c0_i32 : i32
    %1 = arith.extui %0 : i1 to i32
    %c0_i32_0 = arith.constant 0 : i32
    %2 = arith.cmpi ne, %1, %c0_i32_0 : i32
    scf.if %2 {
      %c0_20 = arith.constant 0 : index
      %c0_21 = arith.constant 0 : index
      %29 = vector.load %arg1[%c0_20, %c0_21] : memref<4x128xf32, #tpu.memory_space<vmem>>, vector<4x128xf32>
      %c0_22 = arith.constant 0 : index
      %c0_23 = arith.constant 0 : index
      %30 = vector.load %arg8[%c0_22, %c0_23] : memref<4x128xf32, #tpu.memory_space<vmem>>, vector<4x128xf32>
      tpu.vector_store %arg8[%c0_22, %c0_23], %29 {strides = array<i32>} : memref<4x128xf32, #tpu.memory_space<vmem>>, vector<4x128xf32>,
      %c0_24 = arith.constant 0 : index
      %c0_25 = arith.constant 0 : index
      %31 = vector.load %arg2[%c0_24, %c0_25] : memref<1x16xi32, #tpu.memory_space<vmem>>, vector<1x16xi32>
      %c0_26 = arith.constant 0 : index
      %c0_27 = arith.constant 0 : index
      %32 = vector.load %arg9[%c0_26, %c0_27] : memref<1x16xi32, #tpu.memory_space<vmem>>, vector<1x16xi32>
      tpu.vector_store %arg9[%c0_26, %c0_27], %31 {strides = array<i32>} : memref<1x16xi32, #tpu.memory_space<vmem>>, vector<1x16xi32>,
    } else {
    }
    %c0 = arith.constant 0 : index
    %3 = memref.load %arg7[%c0] : memref<1xf32, #tpu.memory_space<smem>>
    %4 = arith.index_cast %arg0 : i32 to index
    %5 = memref.load %arg6[%4] : memref<8xi32, #tpu.memory_space<smem>>
    %c0_1 = arith.constant 0 : index
    %c0_2 = arith.constant 0 : index
    %6 = vector.load %arg8[%c0_1, %c0_2] : memref<4x128xf32, #tpu.memory_space<vmem>>, vector<4x128xf32>
    %c0_3 = arith.constant 0 : index
    %c0_4 = arith.constant 0 : index
    %c0_5 = arith.constant 0 : index
    %7 = vector.load %arg3[%c0_3, %c0_4, %c0_5] : memref<1x4x128xf32, #tpu.memory_space<vmem>>, vector<1x4x128xf32>
    %8 = vector.shape_cast %7 : vector<1x4x128xf32> to vector<4x128xf32>
    %c0_6 = arith.constant 0 : index
    %c0_7 = arith.constant 0 : index
    %c0_8 = arith.constant 0 : index
    %9 = vector.load %arg4[%c0_6, %c0_7, %c0_8] : memref<1x4x128xf32, #tpu.memory_space<vmem>>, vector<1x4x128xf32>
    %10 = vector.shape_cast %9 : vector<1x4x128xf32> to vector<4x128xf32>
    %cst = arith.constant 1.000000e+00 : f32
    %11 = arith.subf %cst, %3 : f32
    %12 = vector.broadcast %11 : f32 to vector<4x128xf32>
    %13 = arith.mulf %12, %6 : vector<4x128xf32>
    %14 = vector.broadcast %3 : f32 to vector<4x128xf32>
    %15 = arith.mulf %14, %8 : vector<4x128xf32>
    %16 = arith.addf %13, %15 : vector<4x128xf32>
    %cst_9 = arith.constant 5.000000e-01 : f32
    %17 = vector.broadcast %cst_9 : f32 to vector<4x128xf32>
    %18 = arith.cmpf ogt, %10, %17 : vector<4x128xf32>
    %19 = arith.select %18, %16, %6 : vector<4x128xi1>, vector<4x128xf32>
    %c0_10 = arith.constant 0 : index
    %c0_11 = arith.constant 0 : index
    %20 = vector.load %arg8[%c0_10, %c0_11] : memref<4x128xf32, #tpu.memory_space<vmem>>, vector<4x128xf32>
    tpu.vector_store %arg8[%c0_10, %c0_11], %19 {strides = array<i32>} : memref<4x128xf32, #tpu.memory_space<vmem>>, vector<4x128xf32>,
    %c0_12 = arith.constant 0 : index
    %c0_13 = arith.constant 0 : index
    %21 = vector.load %arg9[%c0_12, %c0_13] : memref<1x16xi32, #tpu.memory_space<vmem>>, vector<1x16xi32>
    %c0_14 = arith.constant 0 : index
    %c0_15 = arith.constant 0 : index
    %c0_16 = arith.constant 0 : index
    %22 = vector.load %arg5[%c0_14, %c0_15, %c0_16] : memref<1x1x16xf32, #tpu.memory_space<vmem>>, vector<1x1x16xf32>
    %23 = vector.shape_cast %22 : vector<1x1x16xf32> to vector<1x16xf32>
    %cst_17 = arith.constant 5.000000e-01 : f32
    %24 = vector.broadcast %cst_17 : f32 to vector<1x16xf32>
    %25 = arith.cmpf ogt, %23, %24 : vector<1x16xf32>
    %26 = vector.broadcast %5 : i32 to vector<1x16xi32>
    %27 = arith.select %25, %26, %21 : vector<1x16xi1>, vector<1x16xi32>
    %c0_18 = arith.constant 0 : index
    %c0_19 = arith.constant 0 : index
    %28 = vector.load %arg9[%c0_18, %c0_19] : memref<1x16xi32, #tpu.memory_space<vmem>>, vector<1x16xi32>
    tpu.vector_store %arg9[%c0_18, %c0_19], %27 {strides = array<i32>} : memref<1x16xi32, #tpu.memory_space<vmem>>, vector<1x16xi32>,
    return
  }
  func.func @transform_0(%arg0: i32) -> (i32, i32) {
    %c0_i32 = arith.constant 0 : i32
    %c0_i32_0 = arith.constant 0 : i32
    %c0_i32_1 = arith.constant 0 : i32
    return %c0_i32, %c0_i32_0 : i32, i32
  }
  func.func @transform_1(%arg0: i32) -> (i32, i32) {
    %c0_i32 = arith.constant 0 : i32
    %c0_i32_0 = arith.constant 0 : i32
    %c0_i32_1 = arith.constant 0 : i32
    return %c0_i32, %c0_i32_0 : i32, i32
  }
  func.func @transform_2(%arg0: i32) -> (i32, i32, i32) {
    %c0_i32 = arith.constant 0 : i32
    %c0_i32_0 = arith.constant 0 : i32
    %c0_i32_1 = arith.constant 0 : i32
    return %arg0, %c0_i32, %c0_i32_0 : i32, i32, i32
  }
  func.func @transform_3(%arg0: i32) -> (i32, i32, i32) {
    %c0_i32 = arith.constant 0 : i32
    %c0_i32_0 = arith.constant 0 : i32
    %c0_i32_1 = arith.constant 0 : i32
    return %arg0, %c0_i32, %c0_i32_0 : i32, i32, i32
  }
  func.func @transform_4(%arg0: i32) -> (i32, i32, i32) {
    %c0_i32 = arith.constant 0 : i32
    %c0_i32_0 = arith.constant 0 : i32
    %c0_i32_1 = arith.constant 0 : i32
    return %arg0, %c0_i32, %c0_i32_0 : i32, i32, i32
  }
  func.func @transform_5(%arg0: i32) -> i32 {
    %c0_i32 = arith.constant 0 : i32
    %c0_i32_0 = arith.constant 0 : i32
    return %c0_i32 : i32
  }
  func.func @transform_6(%arg0: i32) -> i32 {
    %c0_i32 = arith.constant 0 : i32
    %c0_i32_0 = arith.constant 0 : i32
    return %c0_i32 : i32
  }
  func.func @transform_7(%arg0: i32) -> (i32, i32) {
    %c0_i32 = arith.constant 0 : i32
    %c0_i32_0 = arith.constant 0 : i32
    %c0_i32_1 = arith.constant 0 : i32
    return %c0_i32, %c0_i32_0 : i32, i32
  }
  func.func @transform_8(%arg0: i32) -> (i32, i32) {
    %c0_i32 = arith.constant 0 : i32
    %c0_i32_0 = arith.constant 0 : i32
    %c0_i32_1 = arith.constant 0 : i32
    return %c0_i32, %c0_i32_0 : i32, i32
  }
}

</mosaic_0001>

<llo_original>
// kernel: batched_memory_write.1
$region0: #{batched_memory_write.1}
  #allocation0 [shape = 'u32[]', space=smem, size = 0x4, offset = 0x4, fixed_abs, tag = 'smem constant byte address 0x4 - core index']
  #allocation1 [shape = 'u32[144,128]{1,0:T(1,128)}', space=vmem, size = 0x12000, scoped, tag = 'internal scratch']
  #allocation2 [shape = 'f32[1]{0:T(128)S(6)}', space=smem, size = 0x200, scoped, tag = 'scoped memory for batched_memory_write.1']
  %s0 = inlined_call_operand.vmem [shape: f32[4,128], index: 0, kind: input, shape index: {}, may-alias: {0,7}]
  %s1 = inlined_call_operand.vmem [shape: s32[1,16], index: 1, kind: input, shape index: {}, may-alias: {1,8}]
  %s2 = inlined_call_operand.vmem [shape: f32[8,4,128], index: 2, kind: input, shape index: {}]
  %s3 = inlined_call_operand.vmem [shape: f32[8,4,128], index: 3, kind: input, shape index: {}]
  %s4 = inlined_call_operand.vmem [shape: f32[8,1,16], index: 4, kind: input, shape index: {}]
  %s5 = inlined_call_operand.vmem [shape: s32[8], index: 5, kind: input, shape index: {}]
  %s6 = inlined_call_operand.<no memory space> [shape: f32[1], index: 6, kind: input, shape index: {}]
  %s7 = inlined_call_operand.vmem [shape: f32[4,128], index: 7, kind: output, shape index: {0}, may-alias: {0,7}]
  %s8 = inlined_call_operand.vmem [shape: s32[1,16], index: 8, kind: output, shape index: {1}, may-alias: {1,8}]
  %9 = xla_tuple %s7, %s8
  %s10 = sld [smem:[#allocation0]]
  $region77: #{batched_memory_write.1} parent=0
    _
  %s12 = ssub.s32 1, %s10
  %s13 = scalar_select 0, %s12, %s10
  %14 = sst [smem:[#allocation2]] %s6
  $region1: #{batched_memory_write.1} parent=0
    #allocation3 [shape = 'u8[512]{0}', space=smem, size = 0x200, scoped, tag = 'input window, operand 5, single buffered']
    #allocation4 [shape = 's32[2]{0}', space=sflag, size = 0x8, scoped, tag = 'scoped memory for batched_memory_write.1']
    %15 = vsyncpa [#allocation4], 0
    loop: start=0, step=1, limit=10
    $region2: #{batched_memory_write.1} parent=1 // loop_pre_header
      _
    $region3: #{batched_memory_write.1} parent=1 // loop_header
      %s17 = sphi 0, %s21
      %p18 = scmp.ge.s32.totalorder %s17, 10
      %s25 = sphi 0, %s25
      %s27 = sphi 0, %s25
      %s28 = sphi 0, %s27
      %s42 = sphi 0, %s28
      %s46 = sphi 0, %s46
      %s48 = sphi 0, %s46
      %s49 = sphi 0, %s48
      %s63 = sphi 0, %s49
      %s69 = sphi 0, %s71
      %s72 = sphi 0, %s69
      %s73 = sphi 0, %s72
      %s89 = sphi 0, %s73
      %s95 = sphi 0, %s97
      %s98 = sphi 0, %s95
      %s99 = sphi 0, %s98
      %s115 = sphi 0, %s99
      %s121 = sphi 0, %s123
      %s124 = sphi 0, %s121
      %s125 = sphi 0, %s124
      %s141 = sphi 0, %s125
      %s145 = sphi 0, %s145
      %s147 = sphi 0, %s145
      %s148 = sphi 0, %s147
      %s162 = sphi 0, %s148
      %s166 = sphi 0, %s166
      %s168 = sphi 0, %s166
      %s169 = sphi 0, %s168
      %s183 = sphi 0, %s169
      %s187 = sphi 0, %s187
      %s189 = sphi 0, %s187
      %s190 = sphi 0, %s189
      %s204 = sphi 0, %s190
      %s208 = sphi 0, %s208
      %s210 = sphi 0, %s208
      %s211 = sphi 0, %s210
      %s225 = sphi 0, %s211
    $region4: #{batched_memory_write.1} parent=1 // loop_header_branch
      %20 = sbr.rel (%p18) target = $region8
    $region5: #{batched_memory_write.1} parent=1 // loop_body
      %s22 = ssub.s32 %s17, 1
      %s23 = ssub.s32 %s17, 2
      %s24 = sadd.s32 %s17, 1
      %s26 = sadd.s32 %s25, 1
      %p29 = scmp.eq.s32.totalorder %s17, 7
      %p30 = scmp.ne.s32.totalorder %s25, %s27
      %p31 = scmp.eq.s32.totalorder %s17, 0
      %p32 = por %p30, %p31
      %p33 = scmp.ne.s32.totalorder %s25, %s27
      %p34 = scmp.eq.s32.totalorder %s22, 7
      %p35 = por %p33, %p34
      %p36 = scmp.ne.s32.totalorder %s27, %s28
      %p37 = scmp.eq.s32.totalorder %s22, 0
      %p38 = por %p36, %p37
      %p39 = scmp.ne.s32.totalorder %s27, %s28
      %p40 = scmp.eq.s32.totalorder %s23, 7
      %p41 = por %p39, %p40
      %p43 = scmp.ne.s32.totalorder %s28, %s42
      %p44 = scmp.eq.s32.totalorder %s23, 0
      %p45 = por %p43, %p44
      %s47 = sadd.s32 %s46, 1
      %p50 = scmp.eq.s32.totalorder %s17, 7
      %p51 = scmp.ne.s32.totalorder %s46, %s48
      %p52 = scmp.eq.s32.totalorder %s17, 0
      %p53 = por %p51, %p52
      %p54 = scmp.ne.s32.totalorder %s46, %s48
      %p55 = scmp.eq.s32.totalorder %s22, 7
      %p56 = por %p54, %p55
      %p57 = scmp.ne.s32.totalorder %s48, %s49
      %p58 = scmp.eq.s32.totalorder %s22, 0
      %p59 = por %p57, %p58
      %p60 = scmp.ne.s32.totalorder %s48, %s49
      %p61 = scmp.eq.s32.totalorder %s23, 7
      %p62 = por %p60, %p61
      %p64 = scmp.ne.s32.totalorder %s49, %s63
      %p65 = scmp.eq.s32.totalorder %s23, 0
      %p66 = por %p64, %p65
      %s67 = ssub.s32 %s17, %s24
      %p68 = scmp.eq.s32.totalorder %s67, 0
      %s70 = sadd.s32 %s69, 1
      %s71 = scalar_select %p68, %s69, %s70
      %p74 = pneg %p68
      %p75 = scmp.eq.s32.totalorder %s17, 7
      %p76 = por %p74, %p75
      %p77 = scmp.ne.s32.totalorder %s69, %s72
      %p78 = scmp.eq.s32.totalorder %s17, 0
      %p79 = por %p77, %p78
      %p80 = scmp.ne.s32.totalorder %s69, %s72
      %p81 = scmp.eq.s32.totalorder %s22, 7
      %p82 = por %p80, %p81
      %p83 = scmp.ne.s32.totalorder %s72, %s73
      %p84 = scmp.eq.s32.totalorder %s22, 0
      %p85 = por %p83, %p84
      %p86 = scmp.ne.s32.totalorder %s72, %s73
      %p87 = scmp.eq.s32.totalorder %s23, 7
      %p88 = por %p86, %p87
      %p90 = scmp.ne.s32.totalorder %s73, %s89
      %p91 = scmp.eq.s32.totalorder %s23, 0
      %p92 = por %p90, %p91
      %s93 = ssub.s32 %s17, %s24
      %p94 = scmp.eq.s32.totalorder %s93, 0
      %s96 = sadd.s32 %s95, 1
      %s97 = scalar_select %p94, %s95, %s96
      %p100 = pneg %p94
      %p101 = scmp.eq.s32.totalorder %s17, 7
      %p102 = por %p100, %p101
      %p103 = scmp.ne.s32.totalorder %s95, %s98
      %p104 = scmp.eq.s32.totalorder %s17, 0
      %p105 = por %p103, %p104
      %p106 = scmp.ne.s32.totalorder %s95, %s98
      %p107 = scmp.eq.s32.totalorder %s22, 7
      %p108 = por %p106, %p107
      %p109 = scmp.ne.s32.totalorder %s98, %s99
      %p110 = scmp.eq.s32.totalorder %s22, 0
      %p111 = por %p109, %p110
      %p112 = scmp.ne.s32.totalorder %s98, %s99
      %p113 = scmp.eq.s32.totalorder %s23, 7
      %p114 = por %p112, %p113
      %p116 = scmp.ne.s32.totalorder %s99, %s115
      %p117 = scmp.eq.s32.totalorder %s23, 0
      %p118 = por %p116, %p117
      %s119 = ssub.s32 %s17, %s24
      %p120 = scmp.eq.s32.totalorder %s119, 0
      %s122 = sadd.s32 %s121, 1
      %s123 = scalar_select %p120, %s121, %s122
      %p126 = pneg %p120
      %p127 = scmp.eq.s32.totalorder %s17, 7
      %p128 = por %p126, %p127
      %p129 = scmp.ne.s32.totalorder %s121, %s124
      %p130 = scmp.eq.s32.totalorder %s17, 0
      %p131 = por %p129, %p130
      %p132 = scmp.ne.s32.totalorder %s121, %s124
      %p133 = scmp.eq.s32.totalorder %s22, 7
      %p134 = por %p132, %p133
      %p135 = scmp.ne.s32.totalorder %s124, %s125
      %p136 = scmp.eq.s32.totalorder %s22, 0
      %p137 = por %p135, %p136
      %p138 = scmp.ne.s32.totalorder %s124, %s125
      %p139 = scmp.eq.s32.totalorder %s23, 7
      %p140 = por %p138, %p139
      %p142 = scmp.ne.s32.totalorder %s125, %s141
      %p143 = scmp.eq.s32.totalorder %s23, 0
      %p144 = por %p142, %p143
      %s146 = sadd.s32 %s145, 1
      %p149 = scmp.eq.s32.totalorder %s17, 7
      %p150 = scmp.ne.s32.totalorder %s145, %s147
      %p151 = scmp.eq.s32.totalorder %s17, 0
      %p152 = por %p150, %p151
      %p153 = scmp.ne.s32.totalorder %s145, %s147
      %p154 = scmp.eq.s32.totalorder %s22, 7
      %p155 = por %p153, %p154
      %p156 = scmp.ne.s32.totalorder %s147, %s148
      %p157 = scmp.eq.s32.totalorder %s22, 0
      %p158 = por %p156, %p157
      %p159 = scmp.ne.s32.totalorder %s147, %s148
      %p160 = scmp.eq.s32.totalorder %s23, 7
      %p161 = por %p159, %p160
      %p163 = scmp.ne.s32.totalorder %s148, %s162
      %p164 = scmp.eq.s32.totalorder %s23, 0
      %p165 = por %p163, %p164
      %s167 = sadd.s32 %s166, 1
      %p170 = scmp.eq.s32.totalorder %s17, 7
      %p171 = scmp.ne.s32.totalorder %s166, %s168
      %p172 = scmp.eq.s32.totalorder %s17, 0
      %p173 = por %p171, %p172
      %p174 = scmp.ne.s32.totalorder %s166, %s168
      %p175 = scmp.eq.s32.totalorder %s22, 7
      %p176 = por %p174, %p175
      %p177 = scmp.ne.s32.totalorder %s168, %s169
      %p178 = scmp.eq.s32.totalorder %s22, 0
      %p179 = por %p177, %p178
      %p180 = scmp.ne.s32.totalorder %s168, %s169
      %p181 = scmp.eq.s32.totalorder %s23, 7
      %p182 = por %p180, %p181
      %p184 = scmp.ne.s32.totalorder %s169, %s183
      %p185 = scmp.eq.s32.totalorder %s23, 0
      %p186 = por %p184, %p185
      %s188 = sadd.s32 %s187, 1
      %p191 = scmp.eq.s32.totalorder %s17, 7
      %p192 = scmp.ne.s32.totalorder %s187, %s189
      %p193 = scmp.eq.s32.totalorder %s17, 0
      %p194 = por %p192, %p193
      %p195 = scmp.ne.s32.totalorder %s187, %s189
      %p196 = scmp.eq.s32.totalorder %s22, 7
      %p197 = por %p195, %p196
      %p198 = scmp.ne.s32.totalorder %s189, %s190
      %p199 = scmp.eq.s32.totalorder %s22, 0
      %p200 = por %p198, %p199
      %p201 = scmp.ne.s32.totalorder %s189, %s190
      %p202 = scmp.eq.s32.totalorder %s23, 7
      %p203 = por %p201, %p202
      %p205 = scmp.ne.s32.totalorder %s190, %s204
      %p206 = scmp.eq.s32.totalorder %s23, 0
      %p207 = por %p205, %p206
      %s209 = sadd.s32 %s208, 1
      %p212 = scmp.eq.s32.totalorder %s17, 7
      %p213 = scmp.ne.s32.totalorder %s208, %s210
      %p214 = scmp.eq.s32.totalorder %s17, 0
      %p215 = por %p213, %p214
      %p216 = scmp.ne.s32.totalorder %s208, %s210
      %p217 = scmp.eq.s32.totalorder %s22, 7
      %p218 = por %p216, %p217
      %p219 = scmp.ne.s32.totalorder %s210, %s211
      %p220 = scmp.eq.s32.totalorder %s22, 0
      %p221 = por %p219, %p220
      %p222 = scmp.ne.s32.totalorder %s210, %s211
      %p223 = scmp.eq.s32.totalorder %s23, 7
      %p224 = por %p222, %p223
      %p226 = scmp.ne.s32.totalorder %s211, %s225
      %p227 = scmp.eq.s32.totalorder %s23, 0
      %p228 = por %p226, %p227
      %p229 = scmp.le.s32.totalorder 1, %s17
      %p230 = scmp.lt.s32.totalorder %s17, 9
      %p231 = pnand %p229, %p230
      %p232 = pneg %p231
      // Predicated region
      $region9: #{batched_memory_write.1} parent=5 // pred_check
        _
      $region10: #{batched_memory_write.1} parent=5 // pred_check_branch
        %234 = sbr.rel (%p231) target = $region12
      $region11: #{batched_memory_write.1} parent=5 // pred_region
        %s235 = ssub.s32 %s17, 1
        // Predicated region
        $region13: #{batched_memory_write.1} parent=11 // pred_check
          %p236 = pneg %p38
        $region14: #{batched_memory_write.1} parent=11 // pred_check_branch
          %238 = sbr.rel (%p236) target = $region16
        $region15: #{batched_memory_write.1} parent=11 // pred_region
          _
        $region16: #{batched_memory_write.1} parent=11 // pred_fallthru
          _
        // Predicated region
        $region17: #{batched_memory_write.1} parent=11 // pred_check
          %p239 = pneg %p59
        $region18: #{batched_memory_write.1} parent=11 // pred_check_branch
          %241 = sbr.rel (%p239) target = $region20
        $region19: #{batched_memory_write.1} parent=11 // pred_region
          _
        $region20: #{batched_memory_write.1} parent=11 // pred_fallthru
          _
        // Predicated region
        $region21: #{batched_memory_write.1} parent=11 // pred_check
          %p242 = pneg %p158
        $region22: #{batched_memory_write.1} parent=11 // pred_check_branch
          %244 = sbr.rel (%p242) target = $region24
        $region23: #{batched_memory_write.1} parent=11 // pred_region
          %s246 = ssub.s32 16, 16
          %247 = vsyncadd [#allocation4], %s246
          %s249 = sshll.u32 %s5, 4
          %s250 = int_to_ptr.vmem [resolvable:$true] %s249
          %252 = dma.vmem_to_smem %s250, 16, [#allocation3], [#allocation4]
        $region24: #{batched_memory_write.1} parent=11 // pred_fallthru
          _
        // Predicated region
        $region25: #{batched_memory_write.1} parent=11 // pred_check
          %p253 = pneg %p179
        $region26: #{batched_memory_write.1} parent=11 // pred_check_branch
          %255 = sbr.rel (%p253) target = $region28
        $region27: #{batched_memory_write.1} parent=11 // pred_region
          _
        $region28: #{batched_memory_write.1} parent=11 // pred_fallthru
          _
      $region12: #{batched_memory_write.1} parent=5 // pred_fallthru
        _
      %p256 = scmp.lt.s32.totalorder %s17, 8
      // Predicated region
      $region29: #{batched_memory_write.1} parent=5 // pred_check
        %p257 = pneg %p256
      $region30: #{batched_memory_write.1} parent=5 // pred_check_branch
        %259 = sbr.rel (%p257) target = $region32
      $region31: #{batched_memory_write.1} parent=5 // pred_region
        // Predicated region
        $region33: #{batched_memory_write.1} parent=31 // pred_check
          %p260 = pneg %p79
        $region34: #{batched_memory_write.1} parent=31 // pred_check_branch
          %262 = sbr.rel (%p260) target = $region36
        $region35: #{batched_memory_write.1} parent=31 // pred_region
          %p263 = scmp.lt.s32.totalorder %s17, 7
          %s264 = scalar_select %p263, %s17, 7
          %s265 = smul.addr %s264, 4
          %s266 = scalar_lea.vmem %s2, %s265
        $region36: #{batched_memory_write.1} parent=31 // pred_fallthru
          _
        // Predicated region
        $region37: #{batched_memory_write.1} parent=31 // pred_check
          %p267 = pneg %p105
        $region38: #{batched_memory_write.1} parent=31 // pred_check_branch
          %269 = sbr.rel (%p267) target = $region40
        $region39: #{batched_memory_write.1} parent=31 // pred_region
          %p270 = scmp.lt.s32.totalorder %s17, 7
          %s271 = scalar_select %p270, %s17, 7
          %s272 = smul.addr %s271, 4
          %s273 = scalar_lea.vmem %s3, %s272
        $region40: #{batched_memory_write.1} parent=31 // pred_fallthru
          _
        // Predicated region
        $region41: #{batched_memory_write.1} parent=31 // pred_check
          %p274 = pneg %p131
        $region42: #{batched_memory_write.1} parent=31 // pred_check_branch
          %276 = sbr.rel (%p274) target = $region44
        $region43: #{batched_memory_write.1} parent=31 // pred_region
          %p277 = scmp.lt.s32.totalorder %s17, 7
          %s278 = scalar_select %p277, %s17, 7
          %s279 = scalar_lea.vmem %s4, %s278
        $region44: #{batched_memory_write.1} parent=31 // pred_fallthru
          _
      $region32: #{batched_memory_write.1} parent=5 // pred_fallthru
        _
      %p280 = scmp.le.s32.totalorder 1, %s17
      %p281 = scmp.lt.s32.totalorder %s17, 9
      %p282 = pnand %p280, %p281
      %p283 = pneg %p282
      // Predicated region
      $region45: #{batched_memory_write.1} parent=5 // pred_check
        _
      $region46: #{batched_memory_write.1} parent=5 // pred_check_branch
        %285 = sbr.rel (%p282) target = $region48
      $region47: #{batched_memory_write.1} parent=5 // pred_region
        %s286 = ssub.s32 %s17, 1
        // Predicated region
        $region49: #{batched_memory_write.1} parent=47 // pred_check
          %p287 = pneg %p158
        $region50: #{batched_memory_write.1} parent=47 // pred_check_branch
          %289 = sbr.rel (%p287) target = $region52
        $region51: #{batched_memory_write.1} parent=47 // pred_region
          %290 = dma.done [#allocation4], 16
        $region52: #{batched_memory_write.1} parent=47 // pred_fallthru
          _
        %291 = sfence
        %p292 = pneg %p38
        %p293 = pneg %p35
        %p294 = pneg %p59
        %p295 = pneg %p56
        %p296 = scmp.lt.s32.totalorder %s22, 7
        %s297 = scalar_select %p296, %s22, 7
        %s298 = smul.addr %s297, 4
        %s299 = scalar_lea.vmem %s2, %s298
        %p300 = pneg %p85
        %p301 = pneg %p82
        %p302 = scmp.lt.s32.totalorder %s22, 7
        %s303 = scalar_select %p302, %s22, 7
        %s304 = smul.addr %s303, 4
        %s305 = scalar_lea.vmem %s3, %s304
        %p306 = pneg %p111
        %p307 = pneg %p108
        %p308 = scmp.lt.s32.totalorder %s22, 7
        %s309 = scalar_select %p308, %s22, 7
        %s310 = scalar_lea.vmem %s4, %s309
        %p311 = pneg %p137
        %p312 = pneg %p134
        %p313 = pneg %p158
        %p314 = pneg %p155
        %p315 = pneg %p179
        %p316 = pneg %p176
        %p317 = pneg %p200
        %p318 = pneg %p197
        %p319 = pneg %p221
        %p320 = pneg %p218
        %p321 = scmp.lt.s32.totalorder %s22, 7
        %s322 = scalar_select %p321, %s22, 7
        %s323 = smul.addr %s322, 4
        %s324 = scalar_lea.vmem %s2, %s323
        %p325 = scmp.lt.s32.totalorder %s22, 7
        %s326 = scalar_select %p325, %s22, 7
        %s327 = smul.addr %s326, 4
        %s328 = scalar_lea.vmem %s3, %s327
        %p329 = scmp.lt.s32.totalorder %s22, 7
        %s330 = scalar_select %p329, %s22, 7
        %s331 = scalar_lea.vmem %s4, %s330
        %p332 = scmp.eq.s32.totalorder %s22, 0
        // Predicated region
        $region53: #{batched_memory_write.1} parent=47 // pred_check
          %p333 = pneg %p332
        $region54: #{batched_memory_write.1} parent=47 // pred_check_branch
          %335 = sbr.rel (%p333) target = $region56
        $region55: #{batched_memory_write.1} parent=47 // pred_region
          %v336 = vld [vmem:[%s0] sm:$0xf]
          %337 = vst [vmem:[%s7] sm:$0xf] %v336
          %v338 = vld [vmem:[%s1] sm:$0x1]
          %vm339 = vcmask 122880
          %340 = vst.msk [vmem:[%s8] sm:$0x1] %vm339, %v338
        $region56: #{batched_memory_write.1} parent=47 // pred_fallthru
          _
        %s341 = sld [smem:[#allocation2]]
        %s342 = sld [smem:[#allocation3 + %s22]]
        %v343 = vld [vmem:[%s7] sm:$0xf]
        %v344 = vld [vmem:[%s324] sm:$0xf]
        %v345 = vld [vmem:[%s328] sm:$0xf]
        %s346 = ssub.f32 1.0, %s341
        %v347 = vstv %s346
        %v348 = vmul.f32 %v347, %v343
        %v349 = vstv %s341
        %v350 = vmul.f32 %v349, %v344
        %v351 = vadd.f32 %v348, %v350
        %vm352 = vcmp.gt.f32.partialorder %v345, 0.5
        %v353 = vsel %vm352, %v351, %v343
        %354 = vst [vmem:[%s7] sm:$0xf] %v353
        %v355 = vld [vmem:[%s8] sm:$0x1]
        %v356 = vld [vmem:[%s331] sm:$0x1]
        %vm357 = vcmp.gt.f32.partialorder %v356, 0.5
        %v358 = vstv %s342
        %v359 = vsel %vm357, %v358, %v355
        %vm360 = vcmask 122880
        %361 = vst.msk [vmem:[%s8] sm:$0x1] %vm360, %v359
        // Predicated region
        $region57: #{batched_memory_write.1} parent=47 // pred_check
          %p362 = pneg %p197
        $region58: #{batched_memory_write.1} parent=47 // pred_check_branch
          %364 = sbr.rel (%p362) target = $region60
        $region59: #{batched_memory_write.1} parent=47 // pred_region
          _
        $region60: #{batched_memory_write.1} parent=47 // pred_fallthru
          _
        // Predicated region
        $region61: #{batched_memory_write.1} parent=47 // pred_check
          %p365 = pneg %p218
        $region62: #{batched_memory_write.1} parent=47 // pred_check_branch
          %367 = sbr.rel (%p365) target = $region64
        $region63: #{batched_memory_write.1} parent=47 // pred_region
          _
        $region64: #{batched_memory_write.1} parent=47 // pred_fallthru
          _
        // Predicated region
        $region65: #{batched_memory_write.1} parent=47 // pred_check
          %p368 = pneg %p197
        $region66: #{batched_memory_write.1} parent=47 // pred_check_branch
          %370 = sbr.rel (%p368) target = $region68
        $region67: #{batched_memory_write.1} parent=47 // pred_region
          _
        $region68: #{batched_memory_write.1} parent=47 // pred_fallthru
          _
        // Predicated region
        $region69: #{batched_memory_write.1} parent=47 // pred_check
          %p371 = pneg %p218
        $region70: #{batched_memory_write.1} parent=47 // pred_check_branch
          %373 = sbr.rel (%p371) target = $region72
        $region71: #{batched_memory_write.1} parent=47 // pred_region
          _
        $region72: #{batched_memory_write.1} parent=47 // pred_fallthru
          _
      $region48: #{batched_memory_write.1} parent=5 // pred_fallthru
        _
      %p374 = scmp.le.s32.totalorder 2, %s17
      // Predicated region
      $region73: #{batched_memory_write.1} parent=5 // pred_check
        %p375 = pneg %p374
      $region74: #{batched_memory_write.1} parent=5 // pred_check_branch
        %377 = sbr.rel (%p375) target = $region76
      $region75: #{batched_memory_write.1} parent=5 // pred_region
        %s378 = ssub.s32 %s17, 2
      $region76: #{batched_memory_write.1} parent=5 // pred_fallthru
        _
    $region6: #{batched_memory_write.1} parent=1 // loop_footer
      %s21 = sadd.s32 1, %s17
    $region7: #{batched_memory_write.1} parent=1 // loop_footer_branch
      %16 = sbr.rel target = $region3
    $region8: #{batched_memory_write.1} parent=1 // loop_exit
      _
    %379 = vsyncpa [#allocation4], 1
    %s380 = scalar_lea.sflag [#allocation4], 1
    %381 = vsyncpa %s380, 1

</llo_original>
